<compile_context>
chip_gen: v7x
topology: tpu7x:2x2x1
jax: 0.10.0
libtpu: 0.0.40
codegen_flags: <defaults>
</compile_context>

<pallas_src>
import functools
import math

import jax
import jax.numpy as jnp
from jax import lax
from jax.experimental import pallas as pl
from jax.experimental.pallas import tpu as pltpu

LANE = 128   # vreg lane width
SUB = 8      # vreg sublane count (register-chunk rows)


def _round_up(a, b):
    return (a + b - 1) // b * b


def _num_tensorcores():
    """2 TensorCores per chip on v7x, 1 on v5e/v6e. Conservative fallback: 1."""
    try:
        kind = jax.devices()[0].device_kind.lower()
    except Exception:
        return 1
    return 2 if "v7" in kind else 1


def _gmm_nll_kernel(cprime_ref, lin_ref, quad_ref,   # SMEM: (K,), (K*dim,), (K*n_pairs,)
                    xw_ref,                          # VMEM: (dim+1, tb, 128)  rows: x_0..x_{dim-1}, -w
                    out_ref,                         # VMEM: (SUB, 128) resident per-core partial sums
                    *, dim, n_comp, pairs, n_chunks, unroll):
    i = pl.program_id(1)

    @pl.when(i == 0)
    def _():
        out_ref[...] = jnp.zeros_like(out_ref)

    # Hoist SMEM scalar reads out of the chunk loop (read once per grid step).
    n_pairs = len(pairs)
    cprime = [cprime_ref[k] for k in range(n_comp)]
    lin = [[lin_ref[k * dim + d] for d in range(dim)] for k in range(n_comp)]
    quad = [[quad_ref[k * n_pairs + p] for p in range(n_pairs)] for k in range(n_comp)]

    def chunk(j, carry):
        off = pl.multiple_of(j * SUB, SUB)
        xs = [xw_ref[d, pl.ds(off, SUB), :] for d in range(dim)]   # dim x (SUB, 128)
        wn = xw_ref[dim, pl.ds(off, SUB), :]                       # (SUB, 128), = -w

        # Cross products x_a*x_b (a<=b), computed once and shared by all K components.
        xx = [xs[a] * xs[b] for (a, b) in pairs]

        # Per-component log-density: c'_k + lin_k . x + sum_p quad_kp * xx_p  (pure VPU work)
        logps = []
        for k in range(n_comp):
            lp = lin[k][0] * xs[0]
            for d in range(1, dim):
                lp = lp + lin[k][d] * xs[d]
            for p in range(n_pairs):
                lp = lp + quad[k][p] * xx[p]
            logps.append(lp + cprime[k])

        # logsumexp over the tiny static component axis.
        m = logps[0]
        for k in range(1, n_comp):
            m = jnp.maximum(m, logps[k])
        s = jnp.exp(logps[0] - m)
        for k in range(1, n_comp):
            s = s + jnp.exp(logps[k] - m)
        lse = m + jnp.log(s)

        # wn is pre-negated, so this accumulates (-lse * w).
        return carry + lse * wn

    carry0 = jnp.zeros((SUB, LANE), jnp.float32)
    acc = lax.fori_loop(0, n_chunks, chunk, carry0, unroll=unroll)
    out_ref[...] += acc


def gmm_nll(weight_base, means, cov, x, w, *, tb_max=512, vmem_budget_bytes=24 << 20):
    """Pallas implementation of GMM.forward. x: (N, dim), w: (N,). Returns scalar f32."""
    assert tb_max % SUB == 0
    N, dim = x.shape
    n_comp = means.shape[0]
    f32 = jnp.float32

    # ---- tiny per-component parameter prep (plain JAX glue, Cholesky-based) ----
    log_pi = jax.nn.log_softmax(weight_base.astype(f32))
    cov = cov.astype(f32)
    chol = jnp.linalg.cholesky(cov)                                      # (K, dim, dim)
    logdet = 2.0 * jnp.sum(jnp.log(jnp.diagonal(chol, axis1=-2, axis2=-1)), axis=-1)
    eye = jnp.eye(dim, dtype=f32)
    prec = jax.vmap(lambda c: jax.scipy.linalg.cho_solve((c, True), eye))(chol)
    prec = 0.5 * (prec + jnp.swapaxes(prec, -1, -2))                     # symmetrize
    const = log_pi - 0.5 * (dim * math.log(2.0 * math.pi) + logdet)      # (K,)

    mu = means.astype(f32)
    lin = jnp.einsum("kij,kj->ki", prec, mu)                             # (K, dim)   P_k mu_k
    cprime = const - 0.5 * jnp.einsum("ki,ki->k", mu, lin)               # (K,)
    pairs = tuple((a, b) for a in range(dim) for b in range(a, dim))
    quad = jnp.stack(
        [(-0.5 * prec[:, a, a]) if a == b else (-prec[:, a, b]) for (a, b) in pairs],
        axis=1)                                                          # (K, n_pairs)

    # ---- tile sizing: lanes = samples, sublanes = 128-sample rows ----
    nb = -(-N // LANE)                                  # 128-sample rows needed
    n_cores = _num_tensorcores()
    n_par = n_cores if nb >= 2 * SUB else 1             # only split when there is enough data

    bpc_raw = -(-nb // n_par)
    bytes_per_row = (dim + 1) * LANE * 4
    tb_budget = max(SUB, (vmem_budget_bytes // (2 * bytes_per_row)) // SUB * SUB)  # double-buffered
    tb = min(tb_max, tb_budget, _round_up(bpc_raw, SUB))
    tb = max(SUB, (tb // SUB) * SUB)
    bpc = _round_up(bpc_raw, tb)                        # rows per core
    nb_pad = bpc * n_par
    n_pad = nb_pad * LANE
    steps = bpc // tb
    n_chunks = tb // SUB
    unroll = True if n_chunks <= 64 else 8              # bound code size for very large tiles

    # ---- pad & pack x and -w into one contiguous slab (single DMA per step) ----
    x_p = jnp.zeros((n_pad, dim), f32).at[:N].set(x.astype(f32))
    wn_p = jnp.zeros((n_pad,), f32).at[:N].set(-w.astype(f32))           # pre-negated; pad -> 0
    xw = jnp.concatenate(
        [x_p.T.reshape(dim, nb_pad, LANE), wn_p.reshape(1, nb_pad, LANE)], axis=0)

    block_bytes = (dim + 1) * tb * LANE * 4
    vmem_limit = int(min(max(4 * block_bytes + (2 << 20), 8 << 20), 32 << 20))

    kernel = functools.partial(_gmm_nll_kernel, dim=dim, n_comp=n_comp,
                               pairs=pairs, n_chunks=n_chunks, unroll=unroll)
    smem_spec = pl.BlockSpec(memory_space=pltpu.MemorySpace.SMEM)

    partials = pl.pallas_call(
        kernel,
        out_shape=jax.ShapeDtypeStruct((n_par * SUB, LANE), f32),
        grid=(n_par, steps),
        in_specs=[
            smem_spec,                                                          # cprime
            smem_spec,                                                          # lin (flat)
            smem_spec,                                                          # quad (flat)
            pl.BlockSpec((dim + 1, tb, LANE), lambda c, i: (0, c * steps + i, 0)),
        ],
        out_specs=pl.BlockSpec((SUB, LANE), lambda c, i: (c, 0)),               # resident per-core
        compiler_params=pltpu.CompilerParams(
            dimension_semantics=("parallel", "arbitrary"),
            vmem_limit_bytes=vmem_limit),
    )(cprime, lin.reshape(-1), quad.reshape(-1), xw)

    # Final tiny cross-lane reduce + mean scale (done once, outside the streaming loop).
    return jnp.sum(partials) / N


def gmm_nll_ref(weight_base, means, cov, x, w):
    """Pure-JAX reference mirroring torch.distributions math."""
    f32 = jnp.float32
    log_pi = jax.nn.log_softmax(weight_base.astype(f32))
    dim = means.shape[1]
    prec = jnp.linalg.inv(cov.astype(f32))
    _, logdet = jnp.linalg.slogdet(cov.astype(f32))
    dx = x.astype(f32)[:, None, :] - means.astype(f32)[None, :, :]      # (N, K, dim)
    q = jnp.einsum("nki,kij,nkj->nk", dx, prec, dx)                     # (N, K)
    logp = log_pi[None, :] - 0.5 * (dim * math.log(2.0 * math.pi)
                                    + logdet[None, :] + q)              # (N, K)
    lse = jax.scipy.special.logsumexp(logp, axis=-1)                    # (N,)
    return jnp.mean(-lse * w.astype(f32))


if __name__ == "__main__":
    n_comp, dim = 3, 2
    N = 256

    key = jax.random.PRNGKey(0)
    k1, k2, k3, k4 = jax.random.split(key, 4)

    # Deterministic, synthetic GMM parameters (mirrors GMM.__init__ shapes).
    weight_base = jax.random.normal(k1, (n_comp,), jnp.float32)          # mixture logits
    means = jax.random.uniform(k2, (n_comp, dim), jnp.float32)           # component means
    A = jax.random.normal(k3, (n_comp, dim, dim), jnp.float32)
    cov = jnp.einsum("kij,klj->kil", A, A) + 0.25 * jnp.eye(dim)[None]   # SPD covariances ("stds")

    x = jax.random.normal(k4, (N, dim), jnp.float32)                     # data
    w = jnp.ones((N,), jnp.float32)                                      # default per-sample weights

    loss = jax.block_until_ready(gmm_nll(weight_base, means, cov, x, w))
    ref = jax.block_until_ready(gmm_nll_ref(weight_base, means, cov, x, w))

    assert jnp.allclose(loss, ref, rtol=1e-5, atol=1e-5), (loss, ref)
    print("KERNEL_OK")
</pallas_src>

<mosaic_0001>
module attributes {stable_mosaic.version = 11 : i64} {
  func.func @_gmm_nll_kernel(%arg0: i32, %arg1: i32, %arg2: memref<3xf32, #tpu.memory_space<smem>>, %arg3: memref<6xf32, #tpu.memory_space<smem>>, %arg4: memref<9xf32, #tpu.memory_space<smem>>, %arg5: memref<3x8x128xf32, #tpu.memory_space<vmem>>, %arg6: memref<8x128xf32, #tpu.memory_space<vmem>>) attributes {dimension_semantics = [#tpu.dimension_semantics<parallel>, #tpu.dimension_semantics<arbitrary>], iteration_bounds = array<i64: 1, 1>, scalar_prefetch = 0 : i64, scratch_operands = 0 : i64, tpu.core_type = #tpu.core_type<tc>, window_params = [{transform_indices = @transform_0, window_bounds = array<i64: 3>}, {transform_indices = @transform_1, window_bounds = array<i64: 6>}, {transform_indices = @transform_2, window_bounds = array<i64: 9>}, {transform_indices = @transform_3, window_bounds = array<i64: 3, 8, 128>}, {transform_indices = @transform_4, window_bounds = array<i64: 8, 128>}]} {
    %c0_i32 = arith.constant 0 : i32
    %0 = arith.cmpi eq, %arg1, %c0_i32 : i32
    %1 = arith.extui %0 : i1 to i32
    %c0_i32_0 = arith.constant 0 : i32
    %2 = arith.cmpi ne, %1, %c0_i32_0 : i32
    scf.if %2 {
      %cst_21 = arith.constant 0.000000e+00 : f32
      %101 = vector.broadcast %cst_21 : f32 to vector<8x128xf32>
      %c0_22 = arith.constant 0 : index
      %c0_23 = arith.constant 0 : index
      %102 = vector.load %arg6[%c0_22, %c0_23] : memref<8x128xf32, #tpu.memory_space<vmem>>, vector<8x128xf32>
      tpu.vector_store %arg6[%c0_22, %c0_23], %101 {strides = array<i32>} : memref<8x128xf32, #tpu.memory_space<vmem>>, vector<8x128xf32>,
    } else {
    }
    %c0 = arith.constant 0 : index
    %3 = memref.load %arg2[%c0] : memref<3xf32, #tpu.memory_space<smem>>
    %c1 = arith.constant 1 : index
    %4 = memref.load %arg2[%c1] : memref<3xf32, #tpu.memory_space<smem>>
    %c2 = arith.constant 2 : index
    %5 = memref.load %arg2[%c2] : memref<3xf32, #tpu.memory_space<smem>>
    %c0_1 = arith.constant 0 : index
    %6 = memref.load %arg3[%c0_1] : memref<6xf32, #tpu.memory_space<smem>>
    %c1_2 = arith.constant 1 : index
    %7 = memref.load %arg3[%c1_2] : memref<6xf32, #tpu.memory_space<smem>>
    %c2_3 = arith.constant 2 : index
    %8 = memref.load %arg3[%c2_3] : memref<6xf32, #tpu.memory_space<smem>>
    %c3 = arith.constant 3 : index
    %9 = memref.load %arg3[%c3] : memref<6xf32, #tpu.memory_space<smem>>
    %c4 = arith.constant 4 : index
    %10 = memref.load %arg3[%c4] : memref<6xf32, #tpu.memory_space<smem>>
    %c5 = arith.constant 5 : index
    %11 = memref.load %arg3[%c5] : memref<6xf32, #tpu.memory_space<smem>>
    %c0_4 = arith.constant 0 : index
    %12 = memref.load %arg4[%c0_4] : memref<9xf32, #tpu.memory_space<smem>>
    %c1_5 = arith.constant 1 : index
    %13 = memref.load %arg4[%c1_5] : memref<9xf32, #tpu.memory_space<smem>>
    %c2_6 = arith.constant 2 : index
    %14 = memref.load %arg4[%c2_6] : memref<9xf32, #tpu.memory_space<smem>>
    %c3_7 = arith.constant 3 : index
    %15 = memref.load %arg4[%c3_7] : memref<9xf32, #tpu.memory_space<smem>>
    %c4_8 = arith.constant 4 : index
    %16 = memref.load %arg4[%c4_8] : memref<9xf32, #tpu.memory_space<smem>>
    %c5_9 = arith.constant 5 : index
    %17 = memref.load %arg4[%c5_9] : memref<9xf32, #tpu.memory_space<smem>>
    %c6 = arith.constant 6 : index
    %18 = memref.load %arg4[%c6] : memref<9xf32, #tpu.memory_space<smem>>
    %c7 = arith.constant 7 : index
    %19 = memref.load %arg4[%c7] : memref<9xf32, #tpu.memory_space<smem>>
    %c8 = arith.constant 8 : index
    %20 = memref.load %arg4[%c8] : memref<9xf32, #tpu.memory_space<smem>>
    %cst = arith.constant 0.000000e+00 : f32
    %21 = vector.broadcast %cst : f32 to vector<8x128xf32>
    %c0_i32_10 = arith.constant 0 : i32
    %c8_i32 = arith.constant 8 : i32
    %22 = arith.muli %c0_i32_10, %c8_i32 : i32
    %23 = tpu.assume_multiple %22, 8 : i32
    %c0_11 = arith.constant 0 : index
    %24 = arith.index_cast %23 : i32 to index
    %c0_12 = arith.constant 0 : index
    %25 = vector.load %arg5[%c0_11, %24, %c0_12] : memref<3x8x128xf32, #tpu.memory_space<vmem>>, vector<1x8x128xf32>
    %26 = vector.shape_cast %25 : vector<1x8x128xf32> to vector<8x128xf32>
    %c1_13 = arith.constant 1 : index
    %27 = arith.index_cast %23 : i32 to index
    %c0_14 = arith.constant 0 : index
    %28 = vector.load %arg5[%c1_13, %27, %c0_14] : memref<3x8x128xf32, #tpu.memory_space<vmem>>, vector<1x8x128xf32>
    %29 = vector.shape_cast %28 : vector<1x8x128xf32> to vector<8x128xf32>
    %c2_15 = arith.constant 2 : index
    %30 = arith.index_cast %23 : i32 to index
    %c0_16 = arith.constant 0 : index
    %31 = vector.load %arg5[%c2_15, %30, %c0_16] : memref<3x8x128xf32, #tpu.memory_space<vmem>>, vector<1x8x128xf32>
    %32 = vector.shape_cast %31 : vector<1x8x128xf32> to vector<8x128xf32>
    %33 = arith.mulf %26, %26 : vector<8x128xf32>
    %34 = arith.mulf %26, %29 : vector<8x128xf32>
    %35 = arith.mulf %29, %29 : vector<8x128xf32>
    %36 = vector.broadcast %6 : f32 to vector<8x128xf32>
    %37 = arith.mulf %36, %26 : vector<8x128xf32>
    %38 = vector.broadcast %7 : f32 to vector<8x128xf32>
    %39 = arith.mulf %38, %29 : vector<8x128xf32>
    %40 = arith.addf %37, %39 : vector<8x128xf32>
    %41 = vector.broadcast %12 : f32 to vector<8x128xf32>
    %42 = arith.mulf %41, %33 : vector<8x128xf32>
    %43 = arith.addf %40, %42 : vector<8x128xf32>
    %44 = vector.broadcast %13 : f32 to vector<8x128xf32>
    %45 = arith.mulf %44, %34 : vector<8x128xf32>
    %46 = arith.addf %43, %45 : vector<8x128xf32>
    %47 = vector.broadcast %14 : f32 to vector<8x128xf32>
    %48 = arith.mulf %47, %35 : vector<8x128xf32>
    %49 = arith.addf %46, %48 : vector<8x128xf32>
    %50 = vector.broadcast %3 : f32 to vector<8x128xf32>
    %51 = arith.addf %49, %50 : vector<8x128xf32>
    %52 = vector.broadcast %8 : f32 to vector<8x128xf32>
    %53 = arith.mulf %52, %26 : vector<8x128xf32>
    %54 = vector.broadcast %9 : f32 to vector<8x128xf32>
    %55 = arith.mulf %54, %29 : vector<8x128xf32>
    %56 = arith.addf %53, %55 : vector<8x128xf32>
    %57 = vector.broadcast %15 : f32 to vector<8x128xf32>
    %58 = arith.mulf %57, %33 : vector<8x128xf32>
    %59 = arith.addf %56, %58 : vector<8x128xf32>
    %60 = vector.broadcast %16 : f32 to vector<8x128xf32>
    %61 = arith.mulf %60, %34 : vector<8x128xf32>
    %62 = arith.addf %59, %61 : vector<8x128xf32>
    %63 = vector.broadcast %17 : f32 to vector<8x128xf32>
    %64 = arith.mulf %63, %35 : vector<8x128xf32>
    %65 = arith.addf %62, %64 : vector<8x128xf32>
    %66 = vector.broadcast %4 : f32 to vector<8x128xf32>
    %67 = arith.addf %65, %66 : vector<8x128xf32>
    %68 = vector.broadcast %10 : f32 to vector<8x128xf32>
    %69 = arith.mulf %68, %26 : vector<8x128xf32>
    %70 = vector.broadcast %11 : f32 to vector<8x128xf32>
    %71 = arith.mulf %70, %29 : vector<8x128xf32>
    %72 = arith.addf %69, %71 : vector<8x128xf32>
    %73 = vector.broadcast %18 : f32 to vector<8x128xf32>
    %74 = arith.mulf %73, %33 : vector<8x128xf32>
    %75 = arith.addf %72, %74 : vector<8x128xf32>
    %76 = vector.broadcast %19 : f32 to vector<8x128xf32>
    %77 = arith.mulf %76, %34 : vector<8x128xf32>
    %78 = arith.addf %75, %77 : vector<8x128xf32>
    %79 = vector.broadcast %20 : f32 to vector<8x128xf32>
    %80 = arith.mulf %79, %35 : vector<8x128xf32>
    %81 = arith.addf %78, %80 : vector<8x128xf32>
    %82 = vector.broadcast %5 : f32 to vector<8x128xf32>
    %83 = arith.addf %81, %82 : vector<8x128xf32>
    %84 = arith.maximumf %51, %67 : vector<8x128xf32>
    %85 = arith.maximumf %84, %83 : vector<8x128xf32>
    %86 = arith.subf %51, %85 : vector<8x128xf32>
    %87 = math.exp %86 : vector<8x128xf32>
    %88 = arith.subf %67, %85 : vector<8x128xf32>
    %89 = math.exp %88 : vector<8x128xf32>
    %90 = arith.addf %87, %89 : vector<8x128xf32>
    %91 = arith.subf %83, %85 : vector<8x128xf32>
    %92 = math.exp %91 : vector<8x128xf32>
    %93 = arith.addf %90, %92 : vector<8x128xf32>
    %94 = math.log %93 : vector<8x128xf32>
    %95 = arith.addf %85, %94 : vector<8x128xf32>
    %96 = arith.mulf %95, %32 : vector<8x128xf32>
    %97 = arith.addf %21, %96 : vector<8x128xf32>
    %c1_i32 = arith.constant 1 : i32
    %c0_17 = arith.constant 0 : index
    %c0_18 = arith.constant 0 : index
    %98 = vector.load %arg6[%c0_17, %c0_18] : memref<8x128xf32, #tpu.memory_space<vmem>>, vector<8x128xf32>
    %99 = arith.addf %98, %97 : vector<8x128xf32>
    %c0_19 = arith.constant 0 : index
    %c0_20 = arith.constant 0 : index
    %100 = vector.load %arg6[%c0_19, %c0_20] : memref<8x128xf32, #tpu.memory_space<vmem>>, vector<8x128xf32>
    tpu.vector_store %arg6[%c0_19, %c0_20], %99 {strides = array<i32>} : memref<8x128xf32, #tpu.memory_space<vmem>>, vector<8x128xf32>,
    return
  }
  func.func @transform_0(%arg0: i32, %arg1: i32) -> i32 {
    %c0_i32 = arith.constant 0 : i32
    %c0_i32_0 = arith.constant 0 : i32
    return %c0_i32 : i32
  }
  func.func @transform_1(%arg0: i32, %arg1: i32) -> i32 {
    %c0_i32 = arith.constant 0 : i32
    %c0_i32_0 = arith.constant 0 : i32
    return %c0_i32 : i32
  }
  func.func @transform_2(%arg0: i32, %arg1: i32) -> i32 {
    %c0_i32 = arith.constant 0 : i32
    %c0_i32_0 = arith.constant 0 : i32
    return %c0_i32 : i32
  }
  func.func @transform_3(%arg0: i32, %arg1: i32) -> (i32, i32, i32) {
    %c1_i32 = arith.constant 1 : i32
    %0 = arith.muli %arg0, %c1_i32 : i32
    %1 = arith.addi %0, %arg1 : i32
    %c0_i32 = arith.constant 0 : i32
    %c0_i32_0 = arith.constant 0 : i32
    %c0_i32_1 = arith.constant 0 : i32
    return %c0_i32, %1, %c0_i32_0 : i32, i32, i32
  }
  func.func @transform_4(%arg0: i32, %arg1: i32) -> (i32, i32) {
    %c0_i32 = arith.constant 0 : i32
    %c0_i32_0 = arith.constant 0 : i32
    return %arg0, %c0_i32 : i32, i32
  }
}

</mosaic_0001>

<llo_original>
// kernel: tpu_custom_call.1
$region0: #{tpu_custom_call.1}
  #allocation0 [shape = 'u32[]', space=smem, size = 0x4, offset = 0x4, fixed_abs, tag = 'smem constant byte address 0x4 - core index']
  #allocation1 [shape = 'u32[144,128]{1,0:T(1,128)}', space=vmem, size = 0x12000, scoped, tag = 'internal scratch']
  %s0 = inlined_call_operand.hbm [shape: f32[3], index: 0, kind: input, shape index: {}]
  %s1 = inlined_call_operand.vmem [shape: f32[6], index: 1, kind: input, shape index: {}]
  %s2 = inlined_call_operand.vmem [shape: f32[9], index: 2, kind: input, shape index: {}]
  %s3 = inlined_call_operand.hbm [shape: f32[3,8,128], index: 3, kind: input, shape index: {}]
  %s4 = inlined_call_operand.hbm [shape: f32[8,128], index: 4, kind: output, shape index: {}]
  %s5 = sld [smem:[#allocation0]]
  $region46: #{tpu_custom_call.1} parent=0
    _
  %s7 = ssub.s32 1, %s5
  %s8 = scalar_select 0, %s7, %s5
  $region1: #{tpu_custom_call.1} parent=0
    #allocation2 [shape = 'u8[512]{0}', space=smem, size = 0x200, scoped, tag = 'input window, operand 0, single buffered']
    #allocation3 [shape = 's32[1]{0}', space=sflag, size = 0x4, scoped, tag = 'scoped memory for tpu_custom_call.1']
    #allocation4 [shape = 's32[1]{0}', space=sflag, size = 0x4, scoped, tag = 'scoped memory for tpu_custom_call.1']
    #allocation5 [shape = 's32[1]{0}', space=sflag, size = 0x4, scoped, tag = 'scoped memory for tpu_custom_call.1']
    #allocation6 [shape = 's32[1]{0}', space=sflag, size = 0x4, scoped, tag = 'scoped memory for tpu_custom_call.1']
    #allocation7 [shape = 'u8[512]{0}', space=smem, size = 0x200, scoped, tag = 'input window, operand 1, single buffered']
    #allocation8 [shape = 'u8[512]{0}', space=smem, size = 0x200, scoped, tag = 'input window, operand 2, single buffered']
    #allocation9 [shape = 's32[1]{0}', space=sflag, size = 0x4, scoped, tag = 'scoped memory for tpu_custom_call.1']
    #allocation10 [shape = 'u8[12288]{0}', space=vmem, size = 0x3000, scoped, tag = 'input window, operand 3, single buffered']
    #allocation11 [shape = 'u8[4096]{0}', space=vmem, size = 0x1000, scoped, tag = 'output window, operand 0, single buffered']
    %9 = vsyncpa [#allocation5], 0
    %10 = vsyncpa [#allocation6], 0
    %11 = vsyncpa [#allocation9], 0
    %12 = vsyncpa [#allocation3], 0
    %13 = vsyncpa [#allocation4], 0
    // Predicated region
    $region2: #{tpu_custom_call.1} parent=1 // pred_check
      _
    $region3: #{tpu_custom_call.1} parent=1 // pred_check_branch
      %15 = sbr.rel (0) target = $region5
    $region4: #{tpu_custom_call.1} parent=1 // pred_region
      %s17 = ssub.s32 16, 16
      %18 = vsyncadd [#allocation5], %s17
      %21 = dma.hbm_to_smem %s0, 16, [#allocation2], [#allocation5]
    $region5: #{tpu_custom_call.1} parent=1 // pred_fallthru
      _
    // Predicated region
    $region6: #{tpu_custom_call.1} parent=1 // pred_check
      _
    $region7: #{tpu_custom_call.1} parent=1 // pred_check_branch
      %23 = sbr.rel (0) target = $region9
    $region8: #{tpu_custom_call.1} parent=1 // pred_region
      %s25 = ssub.s32 16, 16
      %26 = vsyncadd [#allocation6], %s25
      %s28 = sshll.u32 %s1, 4
      %s29 = int_to_ptr.vmem [resolvable:$true] %s28
      %31 = dma.vmem_to_smem %s29, 16, [#allocation7], [#allocation6]
    $region9: #{tpu_custom_call.1} parent=1 // pred_fallthru
      _
    // Predicated region
    $region10: #{tpu_custom_call.1} parent=1 // pred_check
      _
    $region11: #{tpu_custom_call.1} parent=1 // pred_check_branch
      %33 = sbr.rel (0) target = $region13
    $region12: #{tpu_custom_call.1} parent=1 // pred_region
      %s35 = ssub.s32 16, 16
      %36 = vsyncadd [#allocation9], %s35
      %s38 = sshll.u32 %s2, 4
      %s39 = int_to_ptr.vmem [resolvable:$true] %s38
      %41 = dma.vmem_to_smem %s39, 16, [#allocation8], [#allocation9]
    $region13: #{tpu_custom_call.1} parent=1 // pred_fallthru
      _
    // Predicated region
    $region14: #{tpu_custom_call.1} parent=1 // pred_check
      _
    $region15: #{tpu_custom_call.1} parent=1 // pred_check_branch
      %43 = sbr.rel (0) target = $region17
    $region16: #{tpu_custom_call.1} parent=1 // pred_region
      %s44 = sadd.s32 0, 0
      %s46 = ssub.s32 384, 384
      %47 = vsyncadd [#allocation3], %s46
      %s48 = smul.addr %s44, 128
      %s49 = scalar_lea.hbm %s3, %s48
      %s50 = sshll.u32 [#allocation10], 4
      %s51 = int_to_ptr.vmem [resolvable:$true] %s50
      %56 = dma.hbm_to_vmem [thread:$0]  %s49, 384, %s51, [#allocation3], 128, 128, 8
    $region17: #{tpu_custom_call.1} parent=1 // pred_fallthru
      _
    // Predicated region
    $region18: #{tpu_custom_call.1} parent=1 // pred_check
      _
    $region19: #{tpu_custom_call.1} parent=1 // pred_check_branch
      %58 = sbr.rel (0) target = $region21
    $region20: #{tpu_custom_call.1} parent=1 // pred_region
      %59 = dma.done [#allocation5], 16
    $region21: #{tpu_custom_call.1} parent=1 // pred_fallthru
      _
    // Predicated region
    $region22: #{tpu_custom_call.1} parent=1 // pred_check
      _
    $region23: #{tpu_custom_call.1} parent=1 // pred_check_branch
      %61 = sbr.rel (0) target = $region25
    $region24: #{tpu_custom_call.1} parent=1 // pred_region
      %62 = dma.done [#allocation6], 16
    $region25: #{tpu_custom_call.1} parent=1 // pred_fallthru
      _
    // Predicated region
    $region26: #{tpu_custom_call.1} parent=1 // pred_check
      _
    $region27: #{tpu_custom_call.1} parent=1 // pred_check_branch
      %64 = sbr.rel (0) target = $region29
    $region28: #{tpu_custom_call.1} parent=1 // pred_region
      %65 = dma.done [#allocation9], 16
    $region29: #{tpu_custom_call.1} parent=1 // pred_fallthru
      _
    // Predicated region
    $region30: #{tpu_custom_call.1} parent=1 // pred_check
      _
    $region31: #{tpu_custom_call.1} parent=1 // pred_check_branch
      %67 = sbr.rel (0) target = $region33
    $region32: #{tpu_custom_call.1} parent=1 // pred_region
      %68 = dma.done [#allocation3], 384
    $region33: #{tpu_custom_call.1} parent=1 // pred_fallthru
      _
    %69 = sfence
    %s70 = sadd.s32 0, 0
    %p71 = scmp.eq.s32.totalorder 0, 0
    // Predicated region
    $region34: #{tpu_custom_call.1} parent=1 // pred_check
      %p72 = pneg %p71
    $region35: #{tpu_custom_call.1} parent=1 // pred_check_branch
      %74 = sbr.rel (%p72) target = $region37
    $region36: #{tpu_custom_call.1} parent=1 // pred_region
      %75 = vst [vmem:[#allocation11] sm:$0xff] 0.0
    $region37: #{tpu_custom_call.1} parent=1 // pred_fallthru
      _
    %s76 = sld [smem:[#allocation2]]
    %s77 = sld [smem:[#allocation2 + $0x1]]
    %s78 = sld [smem:[#allocation2 + $0x2]]
    %s79 = sld [smem:[#allocation7]]
    %s80 = sld [smem:[#allocation7 + $0x1]]
    %s81 = sld [smem:[#allocation7 + $0x2]]
    %s82 = sld [smem:[#allocation7 + $0x3]]
    %s83 = sld [smem:[#allocation7 + $0x4]]
    %s84 = sld [smem:[#allocation7 + $0x5]]
    %s85 = sld [smem:[#allocation8]]
    %s86 = sld [smem:[#allocation8 + $0x1]]
    %s87 = sld [smem:[#allocation8 + $0x2]]
    %s88 = sld [smem:[#allocation8 + $0x3]]
    %s89 = sld [smem:[#allocation8 + $0x4]]
    %s90 = sld [smem:[#allocation8 + $0x5]]
    %s91 = sld [smem:[#allocation8 + $0x6]]
    %s92 = sld [smem:[#allocation8 + $0x7]]
    %s93 = sld [smem:[#allocation8 + $0x8]]
    %v94 = vld [vmem:[#allocation10] sm:$0xff]
    %s95 = sadd.s32 0, 8
    %s96 = scalar_lea.vmem [#allocation10], %s95
    %v97 = vld [vmem:[%s96] sm:$0xff]
    %s98 = sadd.s32 0, 16
    %s99 = scalar_lea.vmem [#allocation10], %s98
    %v100 = vld [vmem:[%s99] sm:$0xff]
    %v101 = vmul.f32 %v94, %v94
    %v102 = vmul.f32 %v94, %v97
    %v103 = vmul.f32 %v97, %v97
    %v104 = vstv %s79
    %v105 = vmul.f32 %v104, %v94
    %v106 = vstv %s80
    %v107 = vmul.f32 %v106, %v97
    %v108 = vadd.f32 %v105, %v107
    %v109 = vstv %s85
    %v110 = vmul.f32 %v109, %v101
    %v111 = vadd.f32 %v108, %v110
    %v112 = vstv %s86
    %v113 = vmul.f32 %v112, %v102
    %v114 = vadd.f32 %v111, %v113
    %v115 = vstv %s87
    %v116 = vmul.f32 %v115, %v103
    %v117 = vadd.f32 %v114, %v116
    %v118 = vstv %s76
    %v119 = vadd.f32 %v117, %v118
    %v120 = vstv %s81
    %v121 = vmul.f32 %v120, %v94
    %v122 = vstv %s82
    %v123 = vmul.f32 %v122, %v97
    %v124 = vadd.f32 %v121, %v123
    %v125 = vstv %s88
    %v126 = vmul.f32 %v125, %v101
    %v127 = vadd.f32 %v124, %v126
    %v128 = vstv %s89
    %v129 = vmul.f32 %v128, %v102
    %v130 = vadd.f32 %v127, %v129
    %v131 = vstv %s90
    %v132 = vmul.f32 %v131, %v103
    %v133 = vadd.f32 %v130, %v132
    %v134 = vstv %s77
    %v135 = vadd.f32 %v133, %v134
    %v136 = vstv %s83
    %v137 = vmul.f32 %v136, %v94
    %v138 = vstv %s84
    %v139 = vmul.f32 %v138, %v97
    %v140 = vadd.f32 %v137, %v139
    %v141 = vstv %s91
    %v142 = vmul.f32 %v141, %v101
    %v143 = vadd.f32 %v140, %v142
    %v144 = vstv %s92
    %v145 = vmul.f32 %v144, %v102
    %v146 = vadd.f32 %v143, %v145
    %v147 = vstv %s93
    %v148 = vmul.f32 %v147, %v103
    %v149 = vadd.f32 %v146, %v148
    %v150 = vstv %s78
    %v151 = vadd.f32 %v149, %v150
    %v152 = vmax.f32 %v119, %v135
    %v153 = vmax.f32 %v152, %v151
    %v154 = vsub.f32 %v119, %v153
    %v155 = vmul.f32 %v154, 1.442695
    %v156 = vpow.pop %v155
    %v157 = vsub.f32 %v135, %v153
    %v158 = vmul.f32 %v157, 1.442695
    %v159 = vpow.pop %v158
    %v160 = vadd.f32 %v156, %v159
    %v161 = vsub.f32 %v151, %v153
    %v162 = vmul.f32 %v161, 1.442695
    %v163 = vpow.pop %v162
    %v164 = vadd.f32 %v160, %v163
    %v165 = vlog2.pop %v164
    %v166 = vmul.f32 %v165, 0.6931472
    %v167 = vadd.f32 %v153, %v166
    %v168 = vmul.f32 %v167, %v100
    %v169 = vadd.f32 %v168, 0.0
    %v170 = vld [vmem:[#allocation11] sm:$0xff]
    %v171 = vadd.f32 %v170, %v169
    %172 = vst [vmem:[#allocation11] sm:$0xff] %v171
    // Predicated region
    $region38: #{tpu_custom_call.1} parent=1 // pred_check
      _
    $region39: #{tpu_custom_call.1} parent=1 // pred_check_branch
      %174 = sbr.rel (0) target = $region41
    $region40: #{tpu_custom_call.1} parent=1 // pred_region
      %s176 = ssub.s32 128, 128
      %177 = vsyncadd [#allocation4], %s176
      %s179 = sshll.u32 [#allocation11], 4
      %s180 = int_to_ptr.vmem [resolvable:$true] %s179
      %182 = dma.vmem_to_hbm [thread:$0]  %s180, 128, %s4, [#allocation4]
    $region41: #{tpu_custom_call.1} parent=1 // pred_fallthru
      _
    // Predicated region
    $region42: #{tpu_custom_call.1} parent=1 // pred_check
      _
    $region43: #{tpu_custom_call.1} parent=1 // pred_check_branch
      %184 = sbr.rel (0) target = $region45
    $region44: #{tpu_custom_call.1} parent=1 // pred_region
      %185 = dma.done [#allocation4], 128
    $region45: #{tpu_custom_call.1} parent=1 // pred_fallthru
      _
    %186 = vsyncpa [#allocation3], 1
    %187 = vsyncpa [#allocation4], 1
    %188 = vsyncpa [#allocation5], 1
    %189 = vsyncpa [#allocation6], 1
    %190 = vsyncpa [#allocation9], 1

</llo_original>
